<compile_context>
chip_gen: v7x
topology: tpu7x:2x2x1
jax: 0.10.0
libtpu: 0.0.40
codegen_flags: <defaults>
</compile_context>

<pallas_src>
import jax
import jax.numpy as jnp
from jax import lax
from jax.experimental import pallas as pl
from jax.experimental.pallas import tpu as pltpu


def _round_up(x, m):
    return ((x + m - 1) // m) * m


def _tile_rows(B, tm):
    # Largest tile <= tm that still leaves >=2 grid steps when the batch allows it
    # (v7x has 2 TensorCores; a 1-step grid would leave one idle).  Multiple of 16
    # for bf16 sublane packing.
    half = _round_up(max(1, (B + 1) // 2), 16)
    return max(16, min(tm, half))


def discriminator_kernel(x_ref, w1_ref, b1_ref, w2_ref, b2_ref, w3_ref, b3_ref, o_ref):
    # x_ref: (tm, 128) f32 -> in-kernel bf16 cast (VPU cast hides under MXU time).
    x = x_ref[...].astype(jnp.bfloat16)

    # Linear(128, 512) + ReLU   (bf16 operands, f32 accumulation)
    h1 = jnp.dot(x, w1_ref[...], preferred_element_type=jnp.float32) + b1_ref[...]
    h1 = jnp.maximum(h1, 0.0)

    # Linear(512, 256) + ReLU
    h2 = jnp.dot(h1.astype(jnp.bfloat16), w2_ref[...],
                 preferred_element_type=jnp.float32) + b2_ref[...]
    h2 = jnp.maximum(h2, 0.0)

    # Linear(256, 1) + Sigmoid, computed transposed so the logits are lane-dense:
    #   w3_ref is (8, 256) bf16 with row 0 = real weights, rows 1..7 zero (keeps the
    #   MXU LHS at 8 sublanes).  Contraction is over the 256-feature axis of both
    #   operands (q @ k^T style dimension numbers) -> (8, tm); keep row 0 only.
    logit8 = lax.dot_general(
        w3_ref[...], h2.astype(jnp.bfloat16),
        dimension_numbers=(((1,), (1,)), ((), ())),
        preferred_element_type=jnp.float32)              # (8, tm)
    logit = logit8[0:1, :] + b3_ref[...]                  # (1, tm)
    o_ref[0] = jax.nn.sigmoid(logit).astype(o_ref.dtype)  # lane-dense store


def init_params(key):
    """Deterministic init matching PyTorch Linear shapes (stored transposed), f32."""
    k1, k2, k3, k4, k5, k6 = jax.random.split(key, 6)
    w1 = jax.random.uniform(k1, (128, 512), jnp.float32, -1.0, 1.0) / jnp.sqrt(128.0)
    b1 = jax.random.uniform(k2, (1, 512), jnp.float32, -1.0, 1.0) / jnp.sqrt(128.0)
    w2 = jax.random.uniform(k3, (512, 256), jnp.float32, -1.0, 1.0) / jnp.sqrt(512.0)
    b2 = jax.random.uniform(k4, (1, 256), jnp.float32, -1.0, 1.0) / jnp.sqrt(512.0)
    w3 = jax.random.uniform(k5, (256, 1), jnp.float32, -1.0, 1.0) / jnp.sqrt(256.0)
    b3 = jax.random.uniform(k6, (1, 1), jnp.float32, -1.0, 1.0) / jnp.sqrt(256.0)
    return (w1, b1, w2, b2, w3, b3)


def prepare_params(params):
    """One-time kernel-side parameter prep (hoisted out of the forward path):
    bf16 casts for MXU operands; final layer stored as an 8-row (8,256) bf16 block
    with the real weights in row 0."""
    w1, b1, w2, b2, w3, b3 = params
    w1_bf = w1.astype(jnp.bfloat16)
    w2_bf = w2.astype(jnp.bfloat16)
    w3r = jnp.zeros((8, 256), jnp.float32).at[0, :].set(w3[:, 0]).astype(jnp.bfloat16)
    return (w1_bf, b1, w2_bf, b2, w3r, b3)


def discriminator_forward(x, prepared, *, tm=1024):
    """x: [B, 128] float32, prepared = prepare_params(params) -> [B, 1] float32."""
    w1_bf, b1, w2_bf, b2, w3r, b3 = prepared
    B, D = x.shape
    assert D == 128

    tm_eff = _tile_rows(B, tm)
    B_pad = _round_up(B, tm_eff)
    n_steps = B_pad // tm_eff

    x_p = x if B_pad == B else jnp.pad(x, ((0, B_pad - B), (0, 0)))

    flops = 2 * B_pad * (128 * 512 + 512 * 256 + 256 * 1)
    bytes_accessed = (B_pad * 128 * 4            # x (f32 read)
                      + B_pad * 4                # packed logits (f32 write)
                      + (128 * 512 + 512 * 256 + 8 * 256) * 2   # bf16 weights
                      + (512 + 256 + 1) * 4)     # f32 biases
    cost = pl.CostEstimate(flops=flops, transcendentals=B_pad,
                           bytes_accessed=bytes_accessed)

    in_specs = [
        pl.BlockSpec((tm_eff, 128), lambda i: (i, 0)),   # x tile
        pl.BlockSpec((128, 512), lambda i: (0, 0)),      # w1 (full, grid-invariant)
        pl.BlockSpec((1, 512), lambda i: (0, 0)),        # b1
        pl.BlockSpec((512, 256), lambda i: (0, 0)),      # w2
        pl.BlockSpec((1, 256), lambda i: (0, 0)),        # b2
        pl.BlockSpec((8, 256), lambda i: (0, 0)),        # w3 row-block (row 0 real)
        pl.BlockSpec((1, 1), lambda i: (0, 0)),          # b3
    ]
    out_specs = pl.BlockSpec((1, 1, tm_eff), lambda i: (i, 0, 0))

    out = pl.pallas_call(
        discriminator_kernel,
        out_shape=jax.ShapeDtypeStruct((n_steps, 1, tm_eff), jnp.float32),
        grid_spec=pltpu.PrefetchScalarGridSpec(
            num_scalar_prefetch=0,
            grid=(n_steps,),
            in_specs=in_specs,
            out_specs=out_specs,
        ),
        compiler_params=pltpu.CompilerParams(
            dimension_semantics=("parallel",),
        ),
        cost_estimate=cost,
    )(x_p, w1_bf, b1, w2_bf, b2, w3r, b3)

    # (n_steps, 1, tm_eff) row-major == batch order; drop batch padding.
    return out.reshape(B_pad, 1)[:B]


def reference_forward(x, params):
    w1, b1, w2, b2, w3, b3 = params
    h1 = jnp.maximum(x @ w1 + b1, 0.0)
    h2 = jnp.maximum(h1 @ w2 + b2, 0.0)
    return jax.nn.sigmoid(h2 @ w3 + b3)


if __name__ == "__main__":
    key = jax.random.PRNGKey(0)
    kx, kx2, kp = jax.random.split(key, 3)
    params = init_params(kp)
    prepared = prepare_params(params)   # one-time weight prep (hoisted)

    # Small batch (single-step grid path).
    B = 16
    x = jax.random.normal(kx, (B, 128), jnp.float32)
    out = jax.block_until_ready(discriminator_forward(x, prepared))
    ref = reference_forward(x, params)
    assert out.shape == (B, 1)
    # bf16 operands -> relaxed tolerance vs the f32 reference.
    assert jnp.allclose(out, ref, atol=2e-2, rtol=2e-2), "mismatch vs JAX reference (B=16)"

    # Ragged batch (exercises padding + 2-step grid with a shrunk tile).
    B2 = 300
    x2 = jax.random.normal(kx2, (B2, 128), jnp.float32)
    out2 = jax.block_until_ready(discriminator_forward(x2, prepared))
    ref2 = reference_forward(x2, params)
    assert out2.shape == (B2, 1)
    assert jnp.allclose(out2, ref2, atol=2e-2, rtol=2e-2), "mismatch vs JAX reference (B=300)"

    print("KERNEL_OK")
</pallas_src>

<mosaic_0001>
module attributes {stable_mosaic.version = 11 : i64} {
  func.func @discriminator_kernel(%arg0: i32, %arg1: memref<16x128xf32, #tpu.memory_space<vmem>>, %arg2: memref<128x512xbf16, #tpu.memory_space<vmem>>, %arg3: memref<1x512xf32, #tpu.memory_space<vmem>>, %arg4: memref<512x256xbf16, #tpu.memory_space<vmem>>, %arg5: memref<1x256xf32, #tpu.memory_space<vmem>>, %arg6: memref<8x256xbf16, #tpu.memory_space<vmem>>, %arg7: memref<1x1xf32, #tpu.memory_space<vmem>>, %arg8: memref<1x1x16xf32, #tpu.memory_space<vmem>>) attributes {dimension_semantics = [#tpu.dimension_semantics<parallel>], iteration_bounds = array<i64: 1>, scalar_prefetch = 0 : i64, scratch_operands = 0 : i64, tpu.core_type = #tpu.core_type<tc>, window_params = [{transform_indices = @transform_0, window_bounds = array<i64: 16, 128>}, {pipeline_mode = #tpu.pipeline_mode<synchronous>, transform_indices = @transform_1, window_bounds = array<i64: 128, 512>}, {pipeline_mode = #tpu.pipeline_mode<synchronous>, transform_indices = @transform_2, window_bounds = array<i64: 1, 512>}, {pipeline_mode = #tpu.pipeline_mode<synchronous>, transform_indices = @transform_3, window_bounds = array<i64: 512, 256>}, {pipeline_mode = #tpu.pipeline_mode<synchronous>, transform_indices = @transform_4, window_bounds = array<i64: 1, 256>}, {pipeline_mode = #tpu.pipeline_mode<synchronous>, transform_indices = @transform_5, window_bounds = array<i64: 8, 256>}, {pipeline_mode = #tpu.pipeline_mode<synchronous>, transform_indices = @transform_6, window_bounds = array<i64: 1, 1>}, {transform_indices = @transform_7, window_bounds = array<i64: 1, 1, 16>}]} {
    %c0 = arith.constant 0 : index
    %c0_0 = arith.constant 0 : index
    %0 = vector.load %arg1[%c0, %c0_0] : memref<16x128xf32, #tpu.memory_space<vmem>>, vector<16x128xf32>
    %1 = arith.truncf %0 : vector<16x128xf32> to vector<16x128xbf16>
    %c0_1 = arith.constant 0 : index
    %c0_2 = arith.constant 0 : index
    %2 = vector.load %arg2[%c0_1, %c0_2] : memref<128x512xbf16, #tpu.memory_space<vmem>>, vector<128x512xbf16>
    %cst = arith.constant dense<0.000000e+00> : vector<16x512xf32>
    %3 = tpu.matmul %1, %2, %cst {dimension_numbers = #tpu.dot_dimension_numbers<[1], [0], [0], [1], [0, 0, 1, 1], [], []>} : vector<16x128xbf16>, vector<128x512xbf16>, vector<16x512xf32> -> vector<16x512xf32>
    %c0_3 = arith.constant 0 : index
    %c0_4 = arith.constant 0 : index
    %4 = vector.load %arg3[%c0_3, %c0_4] : memref<1x512xf32, #tpu.memory_space<vmem>>, vector<1x512xf32>
    %5 = vector.broadcast %4 : vector<1x512xf32> to vector<16x512xf32>
    %6 = arith.addf %3, %5 : vector<16x512xf32>
    %cst_5 = arith.constant 0.000000e+00 : f32
    %7 = vector.broadcast %cst_5 : f32 to vector<16x512xf32>
    %8 = arith.maximumf %6, %7 : vector<16x512xf32>
    %9 = arith.truncf %8 : vector<16x512xf32> to vector<16x512xbf16>
    %c0_6 = arith.constant 0 : index
    %c0_7 = arith.constant 0 : index
    %10 = vector.load %arg4[%c0_6, %c0_7] : memref<512x256xbf16, #tpu.memory_space<vmem>>, vector<512x256xbf16>
    %cst_8 = arith.constant dense<0.000000e+00> : vector<16x256xf32>
    %11 = tpu.matmul %9, %10, %cst_8 {dimension_numbers = #tpu.dot_dimension_numbers<[1], [0], [0], [1], [0, 0, 1, 1], [], []>} : vector<16x512xbf16>, vector<512x256xbf16>, vector<16x256xf32> -> vector<16x256xf32>
    %c0_9 = arith.constant 0 : index
    %c0_10 = arith.constant 0 : index
    %12 = vector.load %arg5[%c0_9, %c0_10] : memref<1x256xf32, #tpu.memory_space<vmem>>, vector<1x256xf32>
    %13 = vector.broadcast %12 : vector<1x256xf32> to vector<16x256xf32>
    %14 = arith.addf %11, %13 : vector<16x256xf32>
    %cst_11 = arith.constant 0.000000e+00 : f32
    %15 = vector.broadcast %cst_11 : f32 to vector<16x256xf32>
    %16 = arith.maximumf %14, %15 : vector<16x256xf32>
    %c0_12 = arith.constant 0 : index
    %c0_13 = arith.constant 0 : index
    %17 = vector.load %arg6[%c0_12, %c0_13] : memref<8x256xbf16, #tpu.memory_space<vmem>>, vector<8x256xbf16>
    %18 = arith.truncf %16 : vector<16x256xf32> to vector<16x256xbf16>
    %cst_14 = arith.constant dense<0.000000e+00> : vector<8x16xf32>
    %19 = tpu.matmul %17, %18, %cst_14 {dimension_numbers = #tpu.dot_dimension_numbers<[1], [1], [0], [0], [0, 0, 1, 0], [], []>} : vector<8x256xbf16>, vector<16x256xbf16>, vector<8x16xf32> -> vector<8x16xf32>
    %20 = vector.extract_strided_slice %19 {offsets = [0, 0], sizes = [1, 16], strides = [1, 1]} : vector<8x16xf32> to vector<1x16xf32>
    %c0_15 = arith.constant 0 : index
    %c0_16 = arith.constant 0 : index
    %21 = vector.load %arg7[%c0_15, %c0_16] : memref<1x1xf32, #tpu.memory_space<vmem>>, vector<1x1xf32>
    %22 = vector.broadcast %21 : vector<1x1xf32> to vector<1x16xf32>
    %23 = arith.addf %20, %22 : vector<1x16xf32>
    %24 = arith.negf %23 : vector<1x16xf32>
    %25 = math.exp %24 : vector<1x16xf32>
    %cst_17 = arith.constant 1.000000e+00 : f32
    %26 = vector.broadcast %cst_17 : f32 to vector<1x16xf32>
    %27 = arith.addf %26, %25 : vector<1x16xf32>
    %28 = arith.divf %26, %27 : vector<1x16xf32>
    %c0_18 = arith.constant 0 : index
    %c0_19 = arith.constant 0 : index
    %c0_20 = arith.constant 0 : index
    %29 = vector.load %arg8[%c0_18, %c0_19, %c0_20] : memref<1x1x16xf32, #tpu.memory_space<vmem>>, vector<1x1x16xf32>
    %30 = vector.shape_cast %29 : vector<1x1x16xf32> to vector<1x16xf32>
    %31 = vector.shape_cast %28 : vector<1x16xf32> to vector<1x1x16xf32>
    tpu.vector_store %arg8[%c0_18, %c0_19, %c0_20], %31 {strides = array<i32>} : memref<1x1x16xf32, #tpu.memory_space<vmem>>, vector<1x1x16xf32>,
    return
  }
  func.func @transform_0(%arg0: i32) -> (i32, i32) {
    %c0_i32 = arith.constant 0 : i32
    %c0_i32_0 = arith.constant 0 : i32
    return %arg0, %c0_i32 : i32, i32
  }
  func.func @transform_1(%arg0: i32) -> (i32, i32) {
    %c0_i32 = arith.constant 0 : i32
    %c0_i32_0 = arith.constant 0 : i32
    %c0_i32_1 = arith.constant 0 : i32
    return %c0_i32, %c0_i32_0 : i32, i32
  }
  func.func @transform_2(%arg0: i32) -> (i32, i32) {
    %c0_i32 = arith.constant 0 : i32
    %c0_i32_0 = arith.constant 0 : i32
    %c0_i32_1 = arith.constant 0 : i32
    return %c0_i32, %c0_i32_0 : i32, i32
  }
  func.func @transform_3(%arg0: i32) -> (i32, i32) {
    %c0_i32 = arith.constant 0 : i32
    %c0_i32_0 = arith.constant 0 : i32
    %c0_i32_1 = arith.constant 0 : i32
    return %c0_i32, %c0_i32_0 : i32, i32
  }
  func.func @transform_4(%arg0: i32) -> (i32, i32) {
    %c0_i32 = arith.constant 0 : i32
    %c0_i32_0 = arith.constant 0 : i32
    %c0_i32_1 = arith.constant 0 : i32
    return %c0_i32, %c0_i32_0 : i32, i32
  }
  func.func @transform_5(%arg0: i32) -> (i32, i32) {
    %c0_i32 = arith.constant 0 : i32
    %c0_i32_0 = arith.constant 0 : i32
    %c0_i32_1 = arith.constant 0 : i32
    return %c0_i32, %c0_i32_0 : i32, i32
  }
  func.func @transform_6(%arg0: i32) -> (i32, i32) {
    %c0_i32 = arith.constant 0 : i32
    %c0_i32_0 = arith.constant 0 : i32
    %c0_i32_1 = arith.constant 0 : i32
    return %c0_i32, %c0_i32_0 : i32, i32
  }
  func.func @transform_7(%arg0: i32) -> (i32, i32, i32) {
    %c0_i32 = arith.constant 0 : i32
    %c0_i32_0 = arith.constant 0 : i32
    %c0_i32_1 = arith.constant 0 : i32
    return %arg0, %c0_i32, %c0_i32_0 : i32, i32, i32
  }
}

</mosaic_0001>

<llo_original>
// kernel: tpu_custom_call.1
$region0: #{tpu_custom_call.1}
  #allocation0 [shape = 'u32[]', space=smem, size = 0x4, offset = 0x4, fixed_abs, tag = 'smem constant byte address 0x4 - core index']
  #allocation1 [shape = 'u32[144,128]{1,0:T(1,128)}', space=vmem, size = 0x12000, scoped, tag = 'internal scratch']
  #allocation2 [shape = 'f32[1,1]{1,0:T(1,128)S(1)}', space=vmem, size = 0x200, scoped, tag = 'scoped memory for tpu_custom_call.1']
  %s0 = inlined_call_operand.hbm [shape: f32[16,128], index: 0, kind: input, shape index: {}]
  %s1 = inlined_call_operand.hbm [shape: bf16[128,512], index: 1, kind: input, shape index: {}]
  %s2 = inlined_call_operand.vmem [shape: f32[1,512], index: 2, kind: input, shape index: {}]
  %s3 = inlined_call_operand.hbm [shape: bf16[512,256], index: 3, kind: input, shape index: {}]
  %s4 = inlined_call_operand.vmem [shape: f32[1,256], index: 4, kind: input, shape index: {}]
  %s5 = inlined_call_operand.vmem [shape: bf16[8,256], index: 5, kind: input, shape index: {}]
  %s6 = inlined_call_operand.<no memory space> [shape: f32[1,1], index: 6, kind: input, shape index: {}]
  %s7 = inlined_call_operand.hbm [shape: f32[1,1,16], index: 7, kind: output, shape index: {}]
  %s8 = sld [smem:[#allocation0]]
  $region50: #{tpu_custom_call.1} parent=0
    _
  %s10 = ssub.s32 1, %s8
  %s11 = scalar_select 0, %s10, %s8
  %v12 = vstv %s6
  %13 = vst [vmem:[#allocation2] sm:$0x1] %v12
  $region1: #{tpu_custom_call.1} parent=0
    #allocation3 [shape = 'u8[8192]{0}', space=vmem, size = 0x2000, scoped, tag = 'input window, operand 0, single buffered']
    #allocation4 [shape = 's32[1]{0}', space=sflag, size = 0x4, scoped, tag = 'scoped memory for tpu_custom_call.1']
    #allocation5 [shape = 's32[1]{0}', space=sflag, size = 0x4, scoped, tag = 'scoped memory for tpu_custom_call.1']
    #allocation6 [shape = 'u8[131072]{0}', space=vmem, size = 0x20000, scoped, tag = 'input window, operand 1, single buffered']
    #allocation7 [shape = 's32[1]{0}', space=sflag, size = 0x4, scoped, tag = 'scoped memory for tpu_custom_call.1']
    #allocation8 [shape = 'u8[262144]{0}', space=vmem, size = 0x40000, scoped, tag = 'input window, operand 3, single buffered']
    #allocation9 [shape = 'u8[512]{0}', space=vmem, size = 0x400, scoped, tag = 'output window, operand 0, single buffered']
    %14 = vsyncpa [#allocation4], 0
    %15 = vsyncpa [#allocation7], 0
    %16 = vsyncpa [#allocation5], 0
    // Predicated region
    $region2: #{tpu_custom_call.1} parent=1 // pred_check
      _
    $region3: #{tpu_custom_call.1} parent=1 // pred_check_branch
      %18 = sbr.rel (0) target = $region5
    $region4: #{tpu_custom_call.1} parent=1 // pred_region
      %s20 = ssub.s32 256, 256
      %21 = vsyncadd [#allocation4], %s20
      %s22 = sshll.u32 [#allocation3], 4
      %s23 = int_to_ptr.vmem [resolvable:$true] %s22
      %28 = dma.hbm_to_vmem [thread:$0]  %s0, 256, %s23, [#allocation4], 128, 128, 8
    $region5: #{tpu_custom_call.1} parent=1 // pred_fallthru
      _
    // Predicated region
    $region6: #{tpu_custom_call.1} parent=1 // pred_check
      _
    $region7: #{tpu_custom_call.1} parent=1 // pred_check_branch
      %30 = sbr.rel (0) target = $region9
    $region8: #{tpu_custom_call.1} parent=1 // pred_region
      %s32 = ssub.s32 4096, 4096
      %33 = vsyncadd [#allocation7], %s32
      %s34 = sshll.u32 [#allocation6], 4
      %s35 = int_to_ptr.vmem [resolvable:$true] %s34
      %40 = dma.hbm_to_vmem [thread:$0]  %s1, 4096, %s35, [#allocation7], 256, 256, 16
    $region9: #{tpu_custom_call.1} parent=1 // pred_fallthru
      _
    // Predicated region
    $region10: #{tpu_custom_call.1} parent=1 // pred_check
      _
    $region11: #{tpu_custom_call.1} parent=1 // pred_check_branch
      %42 = sbr.rel (0) target = $region13
    $region12: #{tpu_custom_call.1} parent=1 // pred_region
      _
    $region13: #{tpu_custom_call.1} parent=1 // pred_fallthru
      _
    // Predicated region
    $region14: #{tpu_custom_call.1} parent=1 // pred_check
      _
    $region15: #{tpu_custom_call.1} parent=1 // pred_check_branch
      %44 = sbr.rel (0) target = $region17
    $region16: #{tpu_custom_call.1} parent=1 // pred_region
      %s46 = ssub.s32 8192, 8192
      %47 = vsyncadd [#allocation7], %s46
      %s48 = sshll.u32 [#allocation8], 4
      %s49 = int_to_ptr.vmem [resolvable:$true] %s48
      %54 = dma.hbm_to_vmem [thread:$0]  %s3, 8192, %s49, [#allocation7], 128, 128, 8
    $region17: #{tpu_custom_call.1} parent=1 // pred_fallthru
      _
    // Predicated region
    $region18: #{tpu_custom_call.1} parent=1 // pred_check
      _
    $region19: #{tpu_custom_call.1} parent=1 // pred_check_branch
      %56 = sbr.rel (0) target = $region21
    $region20: #{tpu_custom_call.1} parent=1 // pred_region
      _
    $region21: #{tpu_custom_call.1} parent=1 // pred_fallthru
      _
    // Predicated region
    $region22: #{tpu_custom_call.1} parent=1 // pred_check
      _
    $region23: #{tpu_custom_call.1} parent=1 // pred_check_branch
      %58 = sbr.rel (0) target = $region25
    $region24: #{tpu_custom_call.1} parent=1 // pred_region
      _
    $region25: #{tpu_custom_call.1} parent=1 // pred_fallthru
      _
    // Predicated region
    $region26: #{tpu_custom_call.1} parent=1 // pred_check
      _
    $region27: #{tpu_custom_call.1} parent=1 // pred_check_branch
      %60 = sbr.rel (0) target = $region29
    $region28: #{tpu_custom_call.1} parent=1 // pred_region
      _
    $region29: #{tpu_custom_call.1} parent=1 // pred_fallthru
      _
    // Predicated region
    $region30: #{tpu_custom_call.1} parent=1 // pred_check
      _
    $region31: #{tpu_custom_call.1} parent=1 // pred_check_branch
      %62 = sbr.rel (0) target = $region33
    $region32: #{tpu_custom_call.1} parent=1 // pred_region
      %63 = dma.done [#allocation4], 256
    $region33: #{tpu_custom_call.1} parent=1 // pred_fallthru
      _
    // Predicated region
    $region34: #{tpu_custom_call.1} parent=1 // pred_check
      _
    $region35: #{tpu_custom_call.1} parent=1 // pred_check_branch
      %65 = sbr.rel (0) target = $region37
    $region36: #{tpu_custom_call.1} parent=1 // pred_region
      %66 = dma.done [#allocation7], 4096
    $region37: #{tpu_custom_call.1} parent=1 // pred_fallthru
      _
    // Predicated region
    $region38: #{tpu_custom_call.1} parent=1 // pred_check
      _
    $region39: #{tpu_custom_call.1} parent=1 // pred_check_branch
      %68 = sbr.rel (0) target = $region41
    $region40: #{tpu_custom_call.1} parent=1 // pred_region
      %69 = dma.done [#allocation7], 8192
    $region41: #{tpu_custom_call.1} parent=1 // pred_fallthru
      _
    %v71 = vld [vmem:[#allocation3] sm:$0xff]
    %v72 = vld [vmem:[#allocation3 + $0x8] sm:$0xff]
    %v73 = vpack.c.bf16 %v72, %v71
    %v74 = vld [vmem:[#allocation6] sm:$0xff]
    %v75 = vld [vmem:[#allocation6 + $0x8] sm:$0xff]
    %v76 = vld [vmem:[#allocation6 + $0x10] sm:$0xff]
    %v77 = vld [vmem:[#allocation6 + $0x18] sm:$0xff]
    %v78 = vld [vmem:[#allocation6 + $0x20] sm:$0xff]
    %v79 = vld [vmem:[#allocation6 + $0x28] sm:$0xff]
    %v80 = vld [vmem:[#allocation6 + $0x30] sm:$0xff]
    %v81 = vld [vmem:[#allocation6 + $0x38] sm:$0xff]
    %v82 = vld [vmem:[#allocation6 + $0x40] sm:$0xff]
    %v83 = vld [vmem:[#allocation6 + $0x48] sm:$0xff]
    %v84 = vld [vmem:[#allocation6 + $0x50] sm:$0xff]
    %v85 = vld [vmem:[#allocation6 + $0x58] sm:$0xff]
    %v86 = vld [vmem:[#allocation6 + $0x60] sm:$0xff]
    %v87 = vld [vmem:[#allocation6 + $0x68] sm:$0xff]
    %v88 = vld [vmem:[#allocation6 + $0x70] sm:$0xff]
    %v89 = vld [vmem:[#allocation6 + $0x78] sm:$0xff]
    %v90 = vld [vmem:[#allocation6 + $0x80] sm:$0xff]
    %v91 = vld [vmem:[#allocation6 + $0x88] sm:$0xff]
    %v92 = vld [vmem:[#allocation6 + $0x90] sm:$0xff]
    %v93 = vld [vmem:[#allocation6 + $0x98] sm:$0xff]
    %v94 = vld [vmem:[#allocation6 + $0xa0] sm:$0xff]
    %v95 = vld [vmem:[#allocation6 + $0xa8] sm:$0xff]
    %v96 = vld [vmem:[#allocation6 + $0xb0] sm:$0xff]
    %v97 = vld [vmem:[#allocation6 + $0xb8] sm:$0xff]
    %v98 = vld [vmem:[#allocation6 + $0xc0] sm:$0xff]
    %v99 = vld [vmem:[#allocation6 + $0xc8] sm:$0xff]
    %v100 = vld [vmem:[#allocation6 + $0xd0] sm:$0xff]
    %v101 = vld [vmem:[#allocation6 + $0xd8] sm:$0xff]
    %v102 = vld [vmem:[#allocation6 + $0xe0] sm:$0xff]
    %v103 = vld [vmem:[#allocation6 + $0xe8] sm:$0xff]
    %v104 = vld [vmem:[#allocation6 + $0xf0] sm:$0xff]
    %v105 = vld [vmem:[#allocation6 + $0xf8] sm:$0xff]
    %v106 = vld [vmem:[%s2] sm:$0xf]
    %v108 = vlaneseq
    %v109 = vshrl.u32 %v108, 7
    %v110 = vsub.s32 0, %v109
    %v111 = vrot.slane %v106, %v110
    %v112 = vlaneseq
    %v113 = vshrl.u32 %v112, 7
    %v114 = vsub.s32 1, %v113
    %v115 = vrot.slane %v106, %v114
    %v116 = vlaneseq
    %v117 = vshrl.u32 %v116, 7
    %v118 = vsub.s32 2, %v117
    %v119 = vrot.slane %v106, %v118
    %v120 = vlaneseq
    %v121 = vshrl.u32 %v120, 7
    %v122 = vsub.s32 3, %v121
    %v123 = vrot.slane %v106, %v122
    %v160 = vunpack.c.l.b16 %v74
    %v161 = vunpack.c.h.b16 %v74
    %v162 = vunpack.c.l.b16 %v75
    %v163 = vunpack.c.h.b16 %v75
    %v164 = vunpack.c.l.b16 %v76
    %v165 = vunpack.c.h.b16 %v76
    %v166 = vunpack.c.l.b16 %v77
    %v167 = vunpack.c.h.b16 %v77
    %v168 = vunpack.c.l.b16 %v78
    %v169 = vunpack.c.h.b16 %v78
    %v170 = vunpack.c.l.b16 %v79
    %v171 = vunpack.c.h.b16 %v79
    %v172 = vunpack.c.l.b16 %v80
    %v173 = vunpack.c.h.b16 %v80
    %v174 = vunpack.c.l.b16 %v81
    %v175 = vunpack.c.h.b16 %v81
    %v176 = vunpack.c.l.b16 %v82
    %v177 = vunpack.c.h.b16 %v82
    %v178 = vunpack.c.l.b16 %v83
    %v179 = vunpack.c.h.b16 %v83
    %v180 = vunpack.c.l.b16 %v84
    %v181 = vunpack.c.h.b16 %v84
    %v182 = vunpack.c.l.b16 %v85
    %v183 = vunpack.c.h.b16 %v85
    %v184 = vunpack.c.l.b16 %v86
    %v185 = vunpack.c.h.b16 %v86
    %v186 = vunpack.c.l.b16 %v87
    %v187 = vunpack.c.h.b16 %v87
    %v188 = vunpack.c.l.b16 %v88
    %v189 = vunpack.c.h.b16 %v88
    %v190 = vunpack.c.l.b16 %v89
    %v191 = vunpack.c.h.b16 %v89
    %v192 = vunpack.c.l.b16 %v90
    %v193 = vunpack.c.h.b16 %v90
    %v194 = vunpack.c.l.b16 %v91
    %v195 = vunpack.c.h.b16 %v91
    %v196 = vunpack.c.l.b16 %v92
    %v197 = vunpack.c.h.b16 %v92
    %v198 = vunpack.c.l.b16 %v93
    %v199 = vunpack.c.h.b16 %v93
    %v200 = vunpack.c.l.b16 %v94
    %v201 = vunpack.c.h.b16 %v94
    %v202 = vunpack.c.l.b16 %v95
    %v203 = vunpack.c.h.b16 %v95
    %v204 = vunpack.c.l.b16 %v96
    %v205 = vunpack.c.h.b16 %v96
    %v206 = vunpack.c.l.b16 %v97
    %v207 = vunpack.c.h.b16 %v97
    %v208 = vunpack.c.l.b16 %v98
    %v209 = vunpack.c.h.b16 %v98
    %v210 = vunpack.c.l.b16 %v99
    %v211 = vunpack.c.h.b16 %v99
    %v212 = vunpack.c.l.b16 %v100
    %v213 = vunpack.c.h.b16 %v100
    %v214 = vunpack.c.l.b16 %v101
    %v215 = vunpack.c.h.b16 %v101
    %v216 = vunpack.c.l.b16 %v102
    %v217 = vunpack.c.h.b16 %v102
    %v218 = vunpack.c.l.b16 %v103
    %v219 = vunpack.c.h.b16 %v103
    %v220 = vunpack.c.l.b16 %v104
    %v221 = vunpack.c.h.b16 %v104
    %v222 = vunpack.c.l.b16 %v105
    %v223 = vunpack.c.h.b16 %v105
    %v224 = vpack.c.b16 %v164, %v160
    %v225 = vpack.c.b16 %v165, %v161
    %v226 = vpack.c.b16 %v166, %v162
    %v227 = vpack.c.b16 %v167, %v163
    %v228 = vpack.c.b16 %v172, %v168
    %v229 = vpack.c.b16 %v173, %v169
    %v230 = vpack.c.b16 %v174, %v170
    %v231 = vpack.c.b16 %v175, %v171
    %v232 = vpack.c.b16 %v180, %v176
    %v233 = vpack.c.b16 %v181, %v177
    %v234 = vpack.c.b16 %v182, %v178
    %v235 = vpack.c.b16 %v183, %v179
    %v236 = vpack.c.b16 %v188, %v184
    %v237 = vpack.c.b16 %v189, %v185
    %v238 = vpack.c.b16 %v190, %v186
    %v239 = vpack.c.b16 %v191, %v187
    %v240 = vpack.c.b16 %v196, %v192
    %v241 = vpack.c.b16 %v197, %v193
    %v242 = vpack.c.b16 %v198, %v194
    %v243 = vpack.c.b16 %v199, %v195
    %v244 = vpack.c.b16 %v204, %v200
    %v245 = vpack.c.b16 %v205, %v201
    %v246 = vpack.c.b16 %v206, %v202
    %v247 = vpack.c.b16 %v207, %v203
    %v248 = vpack.c.b16 %v212, %v208
    %v249 = vpack.c.b16 %v213, %v209
    %v250 = vpack.c.b16 %v214, %v210
    %v251 = vpack.c.b16 %v215, %v211
    %v252 = vpack.c.b16 %v220, %v216
    %v253 = vpack.c.b16 %v221, %v217
    %v254 = vpack.c.b16 %v222, %v218
    %v255 = vpack.c.b16 %v223, %v219
    %288 = vmatprep.subr.bf16.mxu0 %v225
    %289 = vmatpush1.bf16.msra.mxu0 %v224
    %290 = vmatprep.subr.bf16.mxu0 %v229
    %291 = vmatpush1.bf16.msra.mxu0 %v228
    %292 = vmatprep.subr.bf16.mxu0 %v233
    %293 = vmatpush1.bf16.msra.mxu0 %v232
    %294 = vmatprep.subr.bf16.mxu0 %v237
    %295 = vmatpush1.bf16.msra.mxu0 %v236
    %296 = vmatprep.subr.bf16.mxu0 %v241
    %297 = vmatpush1.bf16.msra.mxu0 %v240
    %298 = vmatprep.subr.bf16.mxu0 %v245
    %299 = vmatpush1.bf16.msra.mxu0 %v244
    %300 = vmatprep.subr.bf16.mxu0 %v249
    %301 = vmatpush1.bf16.msra.mxu0 %v248
    %302 = vmatprep.subr.bf16.mxu0 %v253
    %303 = vmatpush1.bf16.msra.mxu0 %v252
    %304 = vmatprep.subr.bf16.mxu0 0
    %305 = vmatpush1.bf16.msra.mxu0 0
    %306 = vmatprep.subr.bf16.mxu0 0
    %307 = vmatpush1.bf16.msra.mxu0 0
    %308 = vmatprep.subr.bf16.mxu0 0
    %309 = vmatpush1.bf16.msra.mxu0 0
    %310 = vmatprep.subr.bf16.mxu0 0
    %311 = vmatpush1.bf16.msra.mxu0 0
    %312 = vmatprep.subr.bf16.mxu0 0
    %313 = vmatpush1.bf16.msra.mxu0 0
    %314 = vmatprep.subr.bf16.mxu0 0
    %315 = vmatpush1.bf16.msra.mxu0 0
    %316 = vmatprep.subr.bf16.mxu0 0
    %317 = vmatpush1.bf16.msra.mxu0 0
    %318 = vmatprep.subr.bf16.mxu0 0
    %319 = vmatpush1.bf16.msra.mxu0 0
    %320 = vmatprep.mubr.bf16.mxu0 0
    %321 = vmatmul.mubr.bf16.gmra.mrb[0].mxu0 %v73
    %v322 = vpop.f32.mrb[0].mxu0
    %v323 = vadd.f32 %v111, %v322
    %v324 = vpop.f32.mrb[0].mxu0
    %v325 = vadd.f32 %v115, %v324
    %v326 = vpop.f32.mrb[0].mxu0
    %v327 = vadd.f32 %v111, %v326
    %v328 = vpop.f32.mrb[0].mxu0
    %v329 = vadd.f32 %v115, %v328
    %330 = vdwg.mxu0
    %331 = vmatprep.subr.bf16.mxu0 %v227
    %332 = vmatpush1.bf16.msra.mxu0 %v226
    %333 = vmatprep.subr.bf16.mxu0 %v231
    %334 = vmatpush1.bf16.msra.mxu0 %v230
    %335 = vmatprep.subr.bf16.mxu0 %v235
    %336 = vmatpush1.bf16.msra.mxu0 %v234
    %337 = vmatprep.subr.bf16.mxu0 %v239
    %338 = vmatpush1.bf16.msra.mxu0 %v238
    %339 = vmatprep.subr.bf16.mxu0 %v243
    %340 = vmatpush1.bf16.msra.mxu0 %v242
    %341 = vmatprep.subr.bf16.mxu0 %v247
    %342 = vmatpush1.bf16.msra.mxu0 %v246
    %343 = vmatprep.subr.bf16.mxu0 %v251
    %344 = vmatpush1.bf16.msra.mxu0 %v250
    %345 = vmatprep.subr.bf16.mxu0 %v255
    %346 = vmatpush1.bf16.msra.mxu0 %v254
    %347 = vmatprep.subr.bf16.mxu0 0
    %348 = vmatpush1.bf16.msra.mxu0 0
    %349 = vmatprep.subr.bf16.mxu0 0
    %350 = vmatpush1.bf16.msra.mxu0 0
    %351 = vmatprep.subr.bf16.mxu0 0
    %352 = vmatpush1.bf16.msra.mxu0 0
    %353 = vmatprep.subr.bf16.mxu0 0
    %354 = vmatpush1.bf16.msra.mxu0 0
    %355 = vmatprep.subr.bf16.mxu0 0
    %356 = vmatpush1.bf16.msra.mxu0 0
    %357 = vmatprep.subr.bf16.mxu0 0
    %358 = vmatpush1.bf16.msra.mxu0 0
    %359 = vmatprep.subr.bf16.mxu0 0
    %360 = vmatpush1.bf16.msra.mxu0 0
    %361 = vmatprep.subr.bf16.mxu0 0
    %362 = vmatpush1.bf16.msra.mxu0 0
    %363 = vmatprep.mubr.bf16.mxu0 0
    %364 = vmatmul.mubr.bf16.gmra.mrb[0].mxu0 %v73
    %v365 = vpop.f32.mrb[0].mxu0
    %v366 = vadd.f32 %v119, %v365
    %v367 = vpop.f32.mrb[0].mxu0
    %v368 = vadd.f32 %v123, %v367
    %v369 = vpop.f32.mrb[0].mxu0
    %v370 = vadd.f32 %v119, %v369
    %v371 = vpop.f32.mrb[0].mxu0
    %v372 = vadd.f32 %v123, %v371
    %373 = vdwg.mxu0
    %v374 = vmax.f32 %v323, 0.0
    %v375 = vmax.f32 %v325, 0.0
    %v376 = vmax.f32 %v366, 0.0
    %v377 = vmax.f32 %v368, 0.0
    %v378 = vmax.f32 %v327, 0.0
    %v379 = vmax.f32 %v329, 0.0
    %v380 = vmax.f32 %v370, 0.0
    %v381 = vmax.f32 %v372, 0.0
    %v382 = vpack.c.bf16 %v378, %v374
    %v383 = vpack.c.bf16 %v379, %v375
    %v384 = vpack.c.bf16 %v380, %v376
    %v385 = vpack.c.bf16 %v381, %v377
    %v386 = vld [vmem:[#allocation8] sm:$0xff]
    %v387 = vld [vmem:[#allocation8 + $0x8] sm:$0xff]
    %v388 = vld [vmem:[#allocation8 + $0x10] sm:$0xff]
    %v389 = vld [vmem:[#allocation8 + $0x18] sm:$0xff]
    %v390 = vld [vmem:[#allocation8 + $0x20] sm:$0xff]
    %v391 = vld [vmem:[#allocation8 + $0x28] sm:$0xff]
    %v392 = vld [vmem:[#allocation8 + $0x30] sm:$0xff]
    %v393 = vld [vmem:[#allocation8 + $0x38] sm:$0xff]
    %v394 = vld [vmem:[#allocation8 + $0x40] sm:$0xff]
    %v395 = vld [vmem:[#allocation8 + $0x48] sm:$0xff]
    %v396 = vld [vmem:[#allocation8 + $0x50] sm:$0xff]
    %v397 = vld [vmem:[#allocation8 + $0x58] sm:$0xff]
    %v398 = vld [vmem:[#allocation8 + $0x60] sm:$0xff]
    %v399 = vld [vmem:[#allocation8 + $0x68] sm:$0xff]
    %v400 = vld [vmem:[#allocation8 + $0x70] sm:$0xff]
    %v401 = vld [vmem:[#allocation8 + $0x78] sm:$0xff]
    %v402 = vld [vmem:[#allocation8 + $0x80] sm:$0xff]
    %v403 = vld [vmem:[#allocation8 + $0x88] sm:$0xff]
    %v404 = vld [vmem:[#allocation8 + $0x90] sm:$0xff]
    %v405 = vld [vmem:[#allocation8 + $0x98] sm:$0xff]
    %v406 = vld [vmem:[#allocation8 + $0xa0] sm:$0xff]
    %v407 = vld [vmem:[#allocation8 + $0xa8] sm:$0xff]
    %v408 = vld [vmem:[#allocation8 + $0xb0] sm:$0xff]
    %v409 = vld [vmem:[#allocation8 + $0xb8] sm:$0xff]
    %v410 = vld [vmem:[#allocation8 + $0xc0] sm:$0xff]
    %v411 = vld [vmem:[#allocation8 + $0xc8] sm:$0xff]
    %v412 = vld [vmem:[#allocation8 + $0xd0] sm:$0xff]
    %v413 = vld [vmem:[#allocation8 + $0xd8] sm:$0xff]
    %v414 = vld [vmem:[#allocation8 + $0xe0] sm:$0xff]
    %v415 = vld [vmem:[#allocation8 + $0xe8] sm:$0xff]
    %v416 = vld [vmem:[#allocation8 + $0xf0] sm:$0xff]
    %v417 = vld [vmem:[#allocation8 + $0xf8] sm:$0xff]
    %v418 = vld [vmem:[#allocation8 + $0x100] sm:$0xff]
    %v419 = vld [vmem:[#allocation8 + $0x108] sm:$0xff]
    %v420 = vld [vmem:[#allocation8 + $0x110] sm:$0xff]
    %v421 = vld [vmem:[#allocation8 + $0x118] sm:$0xff]
    %v422 = vld [vmem:[#allocation8 + $0x120] sm:$0xff]
    %v423 = vld [vmem:[#allocation8 + $0x128] sm:$0xff]
    %v424 = vld [vmem:[#allocation8 + $0x130] sm:$0xff]
    %v425 = vld [vmem:[#allocation8 + $0x138] sm:$0xff]
    %v426 = vld [vmem:[#allocation8 + $0x140] sm:$0xff]
    %v427 = vld [vmem:[#allocation8 + $0x148] sm:$0xff]
    %v428 = vld [vmem:[#allocation8 + $0x150] sm:$0xff]
    %v429 = vld [vmem:[#allocation8 + $0x158] sm:$0xff]
    %v430 = vld [vmem:[#allocation8 + $0x160] sm:$0xff]
    %v431 = vld [vmem:[#allocation8 + $0x168] sm:$0xff]
    %v432 = vld [vmem:[#allocation8 + $0x170] sm:$0xff]
    %v433 = vld [vmem:[#allocation8 + $0x178] sm:$0xff]
    %v434 = vld [vmem:[#allocation8 + $0x180] sm:$0xff]
    %v435 = vld [vmem:[#allocation8 + $0x188] sm:$0xff]
    %v436 = vld [vmem:[#allocation8 + $0x190] sm:$0xff]
    %v437 = vld [vmem:[#allocation8 + $0x198] sm:$0xff]
    %v438 = vld [vmem:[#allocation8 + $0x1a0] sm:$0xff]
    %v439 = vld [vmem:[#allocation8 + $0x1a8] sm:$0xff]
    %v440 = vld [vmem:[#allocation8 + $0x1b0] sm:$0xff]
    %v441 = vld [vmem:[#allocation8 + $0x1b8] sm:$0xff]
    %v442 = vld [vmem:[#allocation8 + $0x1c0] sm:$0xff]
    %v443 = vld [vmem:[#allocation8 + $0x1c8] sm:$0xff]
    %v444 = vld [vmem:[#allocation8 + $0x1d0] sm:$0xff]
    %v445 = vld [vmem:[#allocation8 + $0x1d8] sm:$0xff]
    %v446 = vld [vmem:[#allocation8 + $0x1e0] sm:$0xff]
    %v447 = vld [vmem:[#allocation8 + $0x1e8] sm:$0xff]
    %v448 = vld [vmem:[#allocation8 + $0x1f0] sm:$0xff]
    %v449 = vld [vmem:[#allocation8 + $0x1f8] sm:$0xff]
    %v450 = vld [vmem:[%s4] sm:$0x3]
    %v452 = vlaneseq
    %v453 = vshrl.u32 %v452, 7
    %v454 = vsub.s32 0, %v453
    %v455 = vrot.slane %v450, %v454
    %v456 = vlaneseq
    %v457 = vshrl.u32 %v456, 7
    %v458 = vsub.s32 1, %v457
    %v459 = vrot.slane %v450, %v458
    %v526 = vunpack.c.l.b16 %v386
    %v527 = vunpack.c.h.b16 %v386
    %v528 = vunpack.c.l.b16 %v387
    %v529 = vunpack.c.h.b16 %v387
    %v530 = vunpack.c.l.b16 %v388
    %v531 = vunpack.c.h.b16 %v388
    %v532 = vunpack.c.l.b16 %v389
    %v533 = vunpack.c.h.b16 %v389
    %v534 = vunpack.c.l.b16 %v390
    %v535 = vunpack.c.h.b16 %v390
    %v536 = vunpack.c.l.b16 %v391
    %v537 = vunpack.c.h.b16 %v391
    %v538 = vunpack.c.l.b16 %v392
    %v539 = vunpack.c.h.b16 %v392
    %v540 = vunpack.c.l.b16 %v393
    %v541 = vunpack.c.h.b16 %v393
    %v542 = vunpack.c.l.b16 %v394
    %v543 = vunpack.c.h.b16 %v394
    %v544 = vunpack.c.l.b16 %v395
    %v545 = vunpack.c.h.b16 %v395
    %v546 = vunpack.c.l.b16 %v396
    %v547 = vunpack.c.h.b16 %v396
    %v548 = vunpack.c.l.b16 %v397
    %v549 = vunpack.c.h.b16 %v397
    %v550 = vunpack.c.l.b16 %v398
    %v551 = vunpack.c.h.b16 %v398
    %v552 = vunpack.c.l.b16 %v399
    %v553 = vunpack.c.h.b16 %v399
    %v554 = vunpack.c.l.b16 %v400
    %v555 = vunpack.c.h.b16 %v400
    %v556 = vunpack.c.l.b16 %v401
    %v557 = vunpack.c.h.b16 %v401
    %v558 = vunpack.c.l.b16 %v402
    %v559 = vunpack.c.h.b16 %v402
    %v560 = vunpack.c.l.b16 %v403
    %v561 = vunpack.c.h.b16 %v403
    %v562 = vunpack.c.l.b16 %v404
    %v563 = vunpack.c.h.b16 %v404
    %v564 = vunpack.c.l.b16 %v405
    %v565 = vunpack.c.h.b16 %v405
    %v566 = vunpack.c.l.b16 %v406
    %v567 = vunpack.c.h.b16 %v406
    %v568 = vunpack.c.l.b16 %v407
    %v569 = vunpack.c.h.b16 %v407
    %v570 = vunpack.c.l.b16 %v408
    %v571 = vunpack.c.h.b16 %v408
    %v572 = vunpack.c.l.b16 %v409
    %v573 = vunpack.c.h.b16 %v409
    %v574 = vunpack.c.l.b16 %v410
    %v575 = vunpack.c.h.b16 %v410
    %v576 = vunpack.c.l.b16 %v411
    %v577 = vunpack.c.h.b16 %v411
    %v578 = vunpack.c.l.b16 %v412
    %v579 = vunpack.c.h.b16 %v412
    %v580 = vunpack.c.l.b16 %v413
    %v581 = vunpack.c.h.b16 %v413
    %v582 = vunpack.c.l.b16 %v414
    %v583 = vunpack.c.h.b16 %v414
    %v584 = vunpack.c.l.b16 %v415
    %v585 = vunpack.c.h.b16 %v415
    %v586 = vunpack.c.l.b16 %v416
    %v587 = vunpack.c.h.b16 %v416
    %v588 = vunpack.c.l.b16 %v417
    %v589 = vunpack.c.h.b16 %v417
    %v590 = vunpack.c.l.b16 %v418
    %v591 = vunpack.c.h.b16 %v418
    %v592 = vunpack.c.l.b16 %v419
    %v593 = vunpack.c.h.b16 %v419
    %v594 = vunpack.c.l.b16 %v420
    %v595 = vunpack.c.h.b16 %v420
    %v596 = vunpack.c.l.b16 %v421
    %v597 = vunpack.c.h.b16 %v421
    %v598 = vunpack.c.l.b16 %v422
    %v599 = vunpack.c.h.b16 %v422
    %v600 = vunpack.c.l.b16 %v423
    %v601 = vunpack.c.h.b16 %v423
    %v602 = vunpack.c.l.b16 %v424
    %v603 = vunpack.c.h.b16 %v424
    %v604 = vunpack.c.l.b16 %v425
    %v605 = vunpack.c.h.b16 %v425
    %v606 = vunpack.c.l.b16 %v426
    %v607 = vunpack.c.h.b16 %v426
    %v608 = vunpack.c.l.b16 %v427
    %v609 = vunpack.c.h.b16 %v427
    %v610 = vunpack.c.l.b16 %v428
    %v611 = vunpack.c.h.b16 %v428
    %v612 = vunpack.c.l.b16 %v429
    %v613 = vunpack.c.h.b16 %v429
    %v614 = vunpack.c.l.b16 %v430
    %v615 = vunpack.c.h.b16 %v430
    %v616 = vunpack.c.l.b16 %v431
    %v617 = vunpack.c.h.b16 %v431
    %v618 = vunpack.c.l.b16 %v432
    %v619 = vunpack.c.h.b16 %v432
    %v620 = vunpack.c.l.b16 %v433
    %v621 = vunpack.c.h.b16 %v433
    %v622 = vunpack.c.l.b16 %v434
    %v623 = vunpack.c.h.b16 %v434
    %v624 = vunpack.c.l.b16 %v435
    %v625 = vunpack.c.h.b16 %v435
    %v626 = vunpack.c.l.b16 %v436
    %v627 = vunpack.c.h.b16 %v436
    %v628 = vunpack.c.l.b16 %v437
    %v629 = vunpack.c.h.b16 %v437
    %v630 = vunpack.c.l.b16 %v438
    %v631 = vunpack.c.h.b16 %v438
    %v632 = vunpack.c.l.b16 %v439
    %v633 = vunpack.c.h.b16 %v439
    %v634 = vunpack.c.l.b16 %v440
    %v635 = vunpack.c.h.b16 %v440
    %v636 = vunpack.c.l.b16 %v441
    %v637 = vunpack.c.h.b16 %v441
    %v638 = vunpack.c.l.b16 %v442
    %v639 = vunpack.c.h.b16 %v442
    %v640 = vunpack.c.l.b16 %v443
    %v641 = vunpack.c.h.b16 %v443
    %v642 = vunpack.c.l.b16 %v444
    %v643 = vunpack.c.h.b16 %v444
    %v644 = vunpack.c.l.b16 %v445
    %v645 = vunpack.c.h.b16 %v445
    %v646 = vunpack.c.l.b16 %v446
    %v647 = vunpack.c.h.b16 %v446
    %v648 = vunpack.c.l.b16 %v447
    %v649 = vunpack.c.h.b16 %v447
    %v650 = vunpack.c.l.b16 %v448
    %v651 = vunpack.c.h.b16 %v448
    %v652 = vunpack.c.l.b16 %v449
    %v653 = vunpack.c.h.b16 %v449
    %v654 = vpack.c.b16 %v528, %v526
    %v655 = vpack.c.b16 %v529, %v527
    %v656 = vpack.c.b16 %v532, %v530
    %v657 = vpack.c.b16 %v533, %v531
    %v658 = vpack.c.b16 %v536, %v534
    %v659 = vpack.c.b16 %v537, %v535
    %v660 = vpack.c.b16 %v540, %v538
    %v661 = vpack.c.b16 %v541, %v539
    %v662 = vpack.c.b16 %v544, %v542
    %v663 = vpack.c.b16 %v545, %v543
    %v664 = vpack.c.b16 %v548, %v546
    %v665 = vpack.c.b16 %v549, %v547
    %v666 = vpack.c.b16 %v552, %v550
    %v667 = vpack.c.b16 %v553, %v551
    %v668 = vpack.c.b16 %v556, %v554
    %v669 = vpack.c.b16 %v557, %v555
    %v670 = vpack.c.b16 %v560, %v558
    %v671 = vpack.c.b16 %v561, %v559
    %v672 = vpack.c.b16 %v564, %v562
    %v673 = vpack.c.b16 %v565, %v563
    %v674 = vpack.c.b16 %v568, %v566
    %v675 = vpack.c.b16 %v569, %v567
    %v676 = vpack.c.b16 %v572, %v570
    %v677 = vpack.c.b16 %v573, %v571
    %v678 = vpack.c.b16 %v576, %v574
    %v679 = vpack.c.b16 %v577, %v575
    %v680 = vpack.c.b16 %v580, %v578
    %v681 = vpack.c.b16 %v581, %v579
    %v682 = vpack.c.b16 %v584, %v582
    %v683 = vpack.c.b16 %v585, %v583
    %v684 = vpack.c.b16 %v588, %v586
    %v685 = vpack.c.b16 %v589, %v587
    %v686 = vpack.c.b16 %v592, %v590
    %v687 = vpack.c.b16 %v593, %v591
    %v688 = vpack.c.b16 %v596, %v594
    %v689 = vpack.c.b16 %v597, %v595
    %v690 = vpack.c.b16 %v600, %v598
    %v691 = vpack.c.b16 %v601, %v599
    %v692 = vpack.c.b16 %v604, %v602
    %v693 = vpack.c.b16 %v605, %v603
    %v694 = vpack.c.b16 %v608, %v606
    %v695 = vpack.c.b16 %v609, %v607
    %v696 = vpack.c.b16 %v612, %v610
    %v697 = vpack.c.b16 %v613, %v611
    %v698 = vpack.c.b16 %v616, %v614
    %v699 = vpack.c.b16 %v617, %v615
    %v700 = vpack.c.b16 %v620, %v618
    %v701 = vpack.c.b16 %v621, %v619
    %v702 = vpack.c.b16 %v624, %v622
    %v703 = vpack.c.b16 %v625, %v623
    %v704 = vpack.c.b16 %v628, %v626
    %v705 = vpack.c.b16 %v629, %v627
    %v706 = vpack.c.b16 %v632, %v630
    %v707 = vpack.c.b16 %v633, %v631
    %v708 = vpack.c.b16 %v636, %v634
    %v709 = vpack.c.b16 %v637, %v635
    %v710 = vpack.c.b16 %v640, %v638
    %v711 = vpack.c.b16 %v641, %v639
    %v712 = vpack.c.b16 %v644, %v642
    %v713 = vpack.c.b16 %v645, %v643
    %v714 = vpack.c.b16 %v648, %v646
    %v715 = vpack.c.b16 %v649, %v647
    %v716 = vpack.c.b16 %v652, %v650
    %v717 = vpack.c.b16 %v653, %v651
    %782 = vmatprep.subr.bf16.mxu0 %v655
    %783 = vmatpush1.bf16.msra.mxu0 %v654
    %784 = vmatprep.subr.bf16.mxu0 %v657
    %785 = vmatpush1.bf16.msra.mxu0 %v656
    %786 = vmatprep.subr.bf16.mxu0 %v659
    %787 = vmatpush1.bf16.msra.mxu0 %v658
    %788 = vmatprep.subr.bf16.mxu0 %v661
    %789 = vmatpush1.bf16.msra.mxu0 %v660
    %790 = vmatprep.subr.bf16.mxu0 %v663
    %791 = vmatpush1.bf16.msra.mxu0 %v662
    %792 = vmatprep.subr.bf16.mxu0 %v665
    %793 = vmatpush1.bf16.msra.mxu0 %v664
    %794 = vmatprep.subr.bf16.mxu0 %v667
    %795 = vmatpush1.bf16.msra.mxu0 %v666
    %796 = vmatprep.subr.bf16.mxu0 %v669
    %797 = vmatpush1.bf16.msra.mxu0 %v668
    %798 = vmatprep.subr.bf16.mxu0 %v671
    %799 = vmatpush1.bf16.msra.mxu0 %v670
    %800 = vmatprep.subr.bf16.mxu0 %v673
    %801 = vmatpush1.bf16.msra.mxu0 %v672
    %802 = vmatprep.subr.bf16.mxu0 %v675
    %803 = vmatpush1.bf16.msra.mxu0 %v674
    %804 = vmatprep.subr.bf16.mxu0 %v677
    %805 = vmatpush1.bf16.msra.mxu0 %v676
    %806 = vmatprep.subr.bf16.mxu0 %v679
    %807 = vmatpush1.bf16.msra.mxu0 %v678
    %808 = vmatprep.subr.bf16.mxu0 %v681
    %809 = vmatpush1.bf16.msra.mxu0 %v680
    %810 = vmatprep.subr.bf16.mxu0 %v683
    %811 = vmatpush1.bf16.msra.mxu0 %v682
    %812 = vmatprep.subr.bf16.mxu0 %v685
    %813 = vmatpush1.bf16.msra.mxu0 %v684
    %814 = vmatprep.mubr.bf16.mxu0 %v383
    %815 = vmatmul.mubr.bf16.gmra.mrb[0].mxu0 %v382
    %v816 = vpop.f32.mrb[0].mxu0
    %v817 = vadd.f32 %v455, %v816
    %v818 = vpop.f32.mrb[0].mxu0
    %v819 = vadd.f32 %v459, %v818
    %v820 = vpop.f32.mrb[0].mxu0
    %v821 = vadd.f32 %v455, %v820
    %v822 = vpop.f32.mrb[0].mxu0
    %v823 = vadd.f32 %v459, %v822
    %824 = vdwg.mxu0
    %825 = vmatprep.subr.bf16.mxu0 %v687
    %826 = vmatpush1.bf16.msra.mxu0 %v686
    %827 = vmatprep.subr.bf16.mxu0 %v689
    %828 = vmatpush1.bf16.msra.mxu0 %v688
    %829 = vmatprep.subr.bf16.mxu0 %v691
    %830 = vmatpush1.bf16.msra.mxu0 %v690
    %831 = vmatprep.subr.bf16.mxu0 %v693
    %832 = vmatpush1.bf16.msra.mxu0 %v692
    %833 = vmatprep.subr.bf16.mxu0 %v695
    %834 = vmatpush1.bf16.msra.mxu0 %v694
    %835 = vmatprep.subr.bf16.mxu0 %v697
    %836 = vmatpush1.bf16.msra.mxu0 %v696
    %837 = vmatprep.subr.bf16.mxu0 %v699
    %838 = vmatpush1.bf16.msra.mxu0 %v698
    %839 = vmatprep.subr.bf16.mxu0 %v701
    %840 = vmatpush1.bf16.msra.mxu0 %v700
    %841 = vmatprep.subr.bf16.mxu0 %v703
    %842 = vmatpush1.bf16.msra.mxu0 %v702
    %843 = vmatprep.subr.bf16.mxu0 %v705
    %844 = vmatpush1.bf16.msra.mxu0 %v704
    %845 = vmatprep.subr.bf16.mxu0 %v707
    %846 = vmatpush1.bf16.msra.mxu0 %v706
    %847 = vmatprep.subr.bf16.mxu0 %v709
    %848 = vmatpush1.bf16.msra.mxu0 %v708
    %849 = vmatprep.subr.bf16.mxu0 %v711
    %850 = vmatpush1.bf16.msra.mxu0 %v710
    %851 = vmatprep.subr.bf16.mxu0 %v713
    %852 = vmatpush1.bf16.msra.mxu0 %v712
    %853 = vmatprep.subr.bf16.mxu0 %v715
    %854 = vmatpush1.bf16.msra.mxu0 %v714
    %855 = vmatprep.subr.bf16.mxu0 %v717
    %856 = vmatpush1.bf16.msra.mxu0 %v716
    %857 = vmatprep.mubr.bf16.mxu0 %v385
    %858 = vmatmul.mubr.bf16.gmra.mrb[0].mxu0 %v384
    %v859 = vpop.f32.mrb[0].mxu0
    %v860 = vadd.f32 %v817, %v859
    %v861 = vpop.f32.mrb[0].mxu0
    %v862 = vadd.f32 %v819, %v861
    %v863 = vpop.f32.mrb[0].mxu0
    %v864 = vadd.f32 %v821, %v863
    %v865 = vpop.f32.mrb[0].mxu0
    %v866 = vadd.f32 %v823, %v865
    %867 = vdwg.mxu0
    %v868 = vmax.f32 %v860, 0.0
    %v869 = vmax.f32 %v862, 0.0
    %v870 = vmax.f32 %v864, 0.0
    %v871 = vmax.f32 %v866, 0.0
    %v872 = vld [vmem:[%s5] sm:$0xff]
    %v873 = vpack.c.bf16 %v870, %v868
    %v874 = vpack.c.bf16 %v871, %v869
    %v876 = vunpack.c.l.b16 %v872
    %v877 = vunpack.c.h.b16 %v872
    %v878 = vpack.c.b16 %v876, %v876
    %v879 = vpack.c.b16 %v877, %v877
    %882 = vmatprep.subr.bf16.mxu0 %v874
    %883 = vmatpush1.bf16.xpose.msra.mxu0 %v873
    %884 = vmatprep.subr.bf16.mxu0 0
    %885 = vmatpush1.bf16.xpose.msra.mxu0 0
    %886 = vmatprep.subr.bf16.mxu0 0
    %887 = vmatpush1.bf16.xpose.msra.mxu0 0
    %888 = vmatprep.subr.bf16.mxu0 0
    %889 = vmatpush1.bf16.xpose.msra.mxu0 0
    %890 = vmatprep.subr.bf16.mxu0 0
    %891 = vmatpush1.bf16.xpose.msra.mxu0 0
    %892 = vmatprep.subr.bf16.mxu0 0
    %893 = vmatpush1.bf16.xpose.msra.mxu0 0
    %894 = vmatprep.subr.bf16.mxu0 0
    %895 = vmatpush1.bf16.xpose.msra.mxu0 0
    %896 = vmatprep.subr.bf16.mxu0 0
    %897 = vmatpush1.bf16.xpose.msra.mxu0 0
    %898 = vmatprep.subr.bf16.mxu0 0
    %899 = vmatpush1.bf16.xpose.msra.mxu0 0
    %900 = vmatprep.subr.bf16.mxu0 0
    %901 = vmatpush1.bf16.xpose.msra.mxu0 0
    %902 = vmatprep.subr.bf16.mxu0 0
    %903 = vmatpush1.bf16.xpose.msra.mxu0 0
    %904 = vmatprep.subr.bf16.mxu0 0
    %905 = vmatpush1.bf16.xpose.msra.mxu0 0
    %906 = vmatprep.subr.bf16.mxu0 0
    %907 = vmatpush1.bf16.xpose.msra.mxu0 0
    %908 = vmatprep.subr.bf16.mxu0 0
    %909 = vmatpush1.bf16.xpose.msra.mxu0 0
    %910 = vmatprep.subr.bf16.mxu0 0
    %911 = vmatpush1.bf16.xpose.msra.mxu0 0
    %912 = vmatprep.subr.bf16.mxu0 0
    %913 = vmatpush1.bf16.xpose.msra.mxu0 0
    %914 = vmatprep.mubr.bf16.mxu0 %v879
    %915 = vmatmul.mubr.bf16.gmra.mrb[0].mxu0 %v878
    %v916 = vpop.f32.mrb[0].mxu0
    %v917 = vadd.f32 0.0, %v916
    %v918 = vpop.f32.mrb[0].mxu0
    %v919 = vpop.f32.mrb[0].mxu0
    %v920 = vpop.f32.mrb[0].mxu0
    %921 = vdwg.mxu0
    %v922 = vld [vmem:[#allocation2] sm:$0x1]
    %924 = vset.pattern.permute.xlu0 0
    %925 = vperm.xlu0 %924, %v922
    %v926 = vpop.permute.xlu0 %925
    %v928 = vlaneseq
    %v929 = vshrl.u32 %v928, 7
    %v930 = vsub.s32 0, %v929
    %v931 = vrot.slane %v926, %v930
    %v932 = vadd.f32 %v917, %v931
    %v933 = vxor.u32 %v932, 2147483648
    %v934 = vmul.f32 %v933, 1.442695
    %v935 = vpow.pop %v934
    %v936 = vadd.f32 %v935, 1.0
    %v937 = vrcp.pop %v936
    %v938 = vmul.f32 1.0, %v937
    %vm939 = vcmask 122880
    %940 = vst.msk [vmem:[#allocation9] sm:$0x1] %vm939, %v938
    // Predicated region
    $region42: #{tpu_custom_call.1} parent=1 // pred_check
      _
    $region43: #{tpu_custom_call.1} parent=1 // pred_check_branch
      %942 = sbr.rel (0) target = $region45
    $region44: #{tpu_custom_call.1} parent=1 // pred_region
      %s944 = ssub.s32 16, 16
      %945 = vsyncadd [#allocation5], %s944
      %s947 = sshll.u32 [#allocation9], 4
      %s948 = int_to_ptr.vmem [resolvable:$true] %s947
      %950 = dma.vmem_to_hbm [thread:$0]  %s948, 16, %s7, [#allocation5]
    $region45: #{tpu_custom_call.1} parent=1 // pred_fallthru
      _
    // Predicated region
    $region46: #{tpu_custom_call.1} parent=1 // pred_check
      _
    $region47: #{tpu_custom_call.1} parent=1 // pred_check_branch
      %952 = sbr.rel (0) target = $region49
    $region48: #{tpu_custom_call.1} parent=1 // pred_region
      %953 = dma.done [#allocation5], 16
    $region49: #{tpu_custom_call.1} parent=1 // pred_fallthru
      _
    %954 = vsyncpa [#allocation4], 1
    %955 = vsyncpa [#allocation7], 1
    %956 = vsyncpa [#allocation5], 1

</llo_original>
